<compile_context>
chip_gen: v5e
topology: v5e:2x2
jax: 0.10.0
libtpu: 0.0.40
codegen_flags: <defaults>
</compile_context>

<pallas_src>
import functools

import jax
import jax.numpy as jnp
import numpy as np
from jax.experimental import pallas as pl
from jax.experimental.pallas import tpu as pltpu


def _round_up(v, m):
    return ((v + m - 1) // m) * m


def _vmem_capacity_bytes():
    try:
        return int(pltpu.get_tpu_info().vmem_capacity_bytes)
    except Exception:
        return 64 * 1024 * 1024  # conservative fallback (v7x per-TC VMEM)


# ----------------------------------------------------------------------------
# One-time parameter packing (do this at model-init time, NOT per forward call).
# ----------------------------------------------------------------------------
def pack_params(params, in_dim):
    """Pack PyTorch-layout params [(W (out,in) f32, b (out,) f32), ...] into
    one resident bf16 weight slab (L, Dp, Dp) and one f32 bias slab (L, 1, Dp),
    zero-padded to a common lane-dense width Dp (multiple of 128)."""
    num_layers = len(params)
    dims = [in_dim] + [int(np.asarray(w).shape[0]) for w, _ in params]
    dp = max(_round_up(d, 128) for d in dims)
    # TODO(synk): for strongly heterogeneous layer widths, pad each layer to its own
    # (in_pad, out_pad) or K-tile the reduction axis instead of the common-Dp slab.
    w_stack = np.zeros((num_layers, dp, dp), np.float32)
    b_stack = np.zeros((num_layers, 1, dp), np.float32)
    for k, (w, b) in enumerate(params):
        w = np.asarray(w, np.float32)
        b = np.asarray(b, np.float32)
        f_out, f_in = w.shape
        w_stack[k, :f_in, :f_out] = w.T           # store transposed (in, out)
        b_stack[k, 0, :f_out] = b
    return {
        "w": jnp.asarray(w_stack, jnp.bfloat16),  # cast once, here
        "b": jnp.asarray(b_stack, jnp.float32),
        "dp": dp,
        "in_dim": int(in_dim),
        "out_dim": int(dims[-1]),
        "num_layers": num_layers,
    }


# ----------------------------------------------------------------------------
# Kernel body: fused Linear -> ReLU chain on one (tm, Dp) activation tile.
# ----------------------------------------------------------------------------
def _mlp_kernel(num_layers, x_ref, w_ref, b_ref, o_ref):
    # x_ref: (tm, Dp) f32   w_ref: (L, Dp, Dp) bf16 (resident)   b_ref: (L, 1, Dp) f32
    h = x_ref[...]                                     # f32 activations
    for k in range(num_layers):                        # unrolled; L is small & static
        # bf16 MXU inputs, f32 accumulation; bias/ReLU in f32 (v5e has no bf16 VPU).
        h = jnp.dot(h.astype(jnp.bfloat16), w_ref[k],
                    preferred_element_type=jnp.float32) + b_ref[k]
        if k != num_layers - 1:                        # ReLU on all but last layer
            h = jnp.maximum(h, 0.0)
    o_ref[...] = h


# ----------------------------------------------------------------------------
# Forward wrapper: only activation padding/tiling happens per call.
# ----------------------------------------------------------------------------
def small_model_forward(x, packed):
    """x: (B, in_dim) f32, packed: output of pack_params. Returns (B, out_dim) f32."""
    dp = packed["dp"]
    in_dim = packed["in_dim"]
    out_dim = packed["out_dim"]
    num_layers = packed["num_layers"]
    w_stack, b_stack = packed["w"], packed["b"]

    x = x.astype(jnp.float32)
    batch = x.shape[0]

    # ---- waste-aware batch tiling (sublane axis), >=2 grid steps for v7x megacore ----
    b8 = _round_up(batch, 8)
    n_tiles = max(pl.cdiv(b8, 512), 2 if b8 >= 16 else 1)
    tm = min(512, _round_up(pl.cdiv(b8, n_tiles), 8))
    b_pad = _round_up(batch, tm)
    grid = (b_pad // tm,)

    # ---- generation-aware VMEM budget ----
    # Count the untiled weight/bias slabs at 2x in case the pipeline double-buffers them.
    resident_bytes = 2 * (w_stack.size * 2 + b_stack.size * 4)
    stream_bytes = 2 * 2 * tm * dp * 4                 # x + out tiles, double-buffered
    live_bytes = tm * dp * 4                           # live f32 activation
    needed = resident_bytes + stream_bytes + live_bytes
    vmem_cap = _vmem_capacity_bytes()
    budget = int(0.75 * vmem_cap)
    # TODO(synk): if a single padded layer exceeds the budget, switch to a K-reduction
    # grid axis ('arbitrary') with a VMEM scratch accumulator instead of asserting.
    assert needed < budget, (
        f"resident weights ({needed} B) exceed VMEM budget ({budget} B); "
        "tile the layer/reduction dims")
    vmem_limit = int(min(vmem_cap, max(needed + (8 << 20), 16 << 20)))

    # ---- pad activations only if needed (zero padding is exact through bias+ReLU) ----
    if batch == b_pad and in_dim == dp:
        x_p = x
    else:
        x_p = jnp.zeros((b_pad, dp), jnp.float32).at[:batch, :in_dim].set(x)

    cost = pl.CostEstimate(
        flops=2 * b_pad * num_layers * dp * dp,
        transcendentals=0,
        bytes_accessed=b_pad * dp * 4 * 2 + w_stack.size * 2 + b_stack.size * 4,
    )

    out_p = pl.pallas_call(
        functools.partial(_mlp_kernel, num_layers),
        out_shape=jax.ShapeDtypeStruct((b_pad, dp), jnp.float32),
        grid=grid,
        in_specs=[
            pl.BlockSpec((tm, dp), lambda i: (i, 0)),              # stream x tiles
            pl.BlockSpec(memory_space=pltpu.MemorySpace.VMEM),     # resident weights
            pl.BlockSpec(memory_space=pltpu.MemorySpace.VMEM),     # resident biases
        ],
        out_specs=pl.BlockSpec((tm, dp), lambda i: (i, 0)),
        compiler_params=pltpu.CompilerParams(
            dimension_semantics=("parallel",),
            vmem_limit_bytes=vmem_limit,
        ),
        cost_estimate=cost,
    )(x_p, w_stack, b_stack)

    return out_p[:batch, :out_dim]


# ----------------------------------------------------------------------------
# Init + pure-JAX reference (matches the PyTorch module)
# ----------------------------------------------------------------------------
def init_params(sizes, key):
    """Deterministic init mimicking nn.Linear default U(-1/sqrt(in), 1/sqrt(in))."""
    params = []
    for k in range(len(sizes) - 1):
        fan_in, fan_out = sizes[k], sizes[k + 1]
        key, kw, kb = jax.random.split(key, 3)
        bound = 1.0 / np.sqrt(fan_in)
        w = jax.random.uniform(kw, (fan_out, fan_in), jnp.float32,
                               minval=-bound, maxval=bound)   # PyTorch layout (out,in)
        b = jax.random.uniform(kb, (fan_out,), jnp.float32,
                               minval=-bound, maxval=bound)
        params.append((w, b))
    return params


def reference_forward(x, params):
    h = x
    n = len(params)
    for k, (w, b) in enumerate(params):
        h = h @ w.T + b
        if k != n - 1:
            h = jnp.maximum(h, 0.0)
    return h


if __name__ == "__main__":
    # SmallModel(sizes=[32, 64, 48, 16]) with batch=8
    sizes = [32, 64, 48, 16]
    batch = 8

    key = jax.random.PRNGKey(0)
    key, kx = jax.random.split(key)
    x = jax.random.normal(kx, (batch, sizes[0]), jnp.float32)
    params = init_params(sizes, key)

    packed = pack_params(params, sizes[0])            # one-time packing (model init)

    out = small_model_forward(x, packed)
    out = jax.block_until_ready(out)

    ref = reference_forward(x, params)
    # bf16 MXU inputs with f32 accumulation vs f32 reference -> loosened tolerance.
    np.testing.assert_allclose(np.asarray(out), np.asarray(ref),
                               rtol=2e-2, atol=2e-2)
    print("KERNEL_OK")
</pallas_src>

<mosaic_0001>
module attributes {stable_mosaic.version = 11 : i64} {
  func.func @_mlp_kernel(%arg0: i32, %arg1: memref<8x128xf32, #tpu.memory_space<vmem>>, %arg2: memref<3x128x128xbf16, #tpu.memory_space<vmem>>, %arg3: memref<3x1x128xf32, #tpu.memory_space<vmem>>, %arg4: memref<8x128xf32, #tpu.memory_space<vmem>>) attributes {dimension_semantics = [#tpu.dimension_semantics<parallel>], iteration_bounds = array<i64: 1>, scalar_prefetch = 0 : i64, scratch_operands = 0 : i64, tpu.core_type = #tpu.core_type<tc>, window_params = [{transform_indices = @transform_0, window_bounds = array<i64: 8, 128>}, {pipeline_mode = #tpu.pipeline_mode<synchronous>, transform_indices = @transform_1, window_bounds = array<i64: 3, 128, 128>}, {pipeline_mode = #tpu.pipeline_mode<synchronous>, transform_indices = @transform_2, window_bounds = array<i64: 3, 1, 128>}, {transform_indices = @transform_3, window_bounds = array<i64: 8, 128>}]} {
    %c0 = arith.constant 0 : index
    %c0_0 = arith.constant 0 : index
    %0 = vector.load %arg1[%c0, %c0_0] : memref<8x128xf32, #tpu.memory_space<vmem>>, vector<8x128xf32>
    %1 = arith.truncf %0 : vector<8x128xf32> to vector<8x128xbf16>
    %c0_1 = arith.constant 0 : index
    %c0_2 = arith.constant 0 : index
    %c0_3 = arith.constant 0 : index
    %2 = vector.load %arg2[%c0_1, %c0_2, %c0_3] : memref<3x128x128xbf16, #tpu.memory_space<vmem>>, vector<1x128x128xbf16>
    %3 = vector.shape_cast %2 : vector<1x128x128xbf16> to vector<128x128xbf16>
    %cst = arith.constant dense<0.000000e+00> : vector<8x128xf32>
    %4 = tpu.matmul %1, %3, %cst {dimension_numbers = #tpu.dot_dimension_numbers<[1], [0], [0], [1], [0, 0, 1, 1], [], []>} : vector<8x128xbf16>, vector<128x128xbf16>, vector<8x128xf32> -> vector<8x128xf32>
    %c0_4 = arith.constant 0 : index
    %c0_5 = arith.constant 0 : index
    %c0_6 = arith.constant 0 : index
    %5 = vector.load %arg3[%c0_4, %c0_5, %c0_6] : memref<3x1x128xf32, #tpu.memory_space<vmem>>, vector<1x1x128xf32>
    %6 = vector.shape_cast %5 : vector<1x1x128xf32> to vector<1x128xf32>
    %7 = vector.broadcast %6 : vector<1x128xf32> to vector<8x128xf32>
    %8 = arith.addf %4, %7 : vector<8x128xf32>
    %cst_7 = arith.constant 0.000000e+00 : f32
    %9 = vector.broadcast %cst_7 : f32 to vector<8x128xf32>
    %10 = arith.maximumf %8, %9 : vector<8x128xf32>
    %11 = arith.truncf %10 : vector<8x128xf32> to vector<8x128xbf16>
    %c1 = arith.constant 1 : index
    %c0_8 = arith.constant 0 : index
    %c0_9 = arith.constant 0 : index
    %12 = vector.load %arg2[%c1, %c0_8, %c0_9] : memref<3x128x128xbf16, #tpu.memory_space<vmem>>, vector<1x128x128xbf16>
    %13 = vector.shape_cast %12 : vector<1x128x128xbf16> to vector<128x128xbf16>
    %cst_10 = arith.constant dense<0.000000e+00> : vector<8x128xf32>
    %14 = tpu.matmul %11, %13, %cst_10 {dimension_numbers = #tpu.dot_dimension_numbers<[1], [0], [0], [1], [0, 0, 1, 1], [], []>} : vector<8x128xbf16>, vector<128x128xbf16>, vector<8x128xf32> -> vector<8x128xf32>
    %c1_11 = arith.constant 1 : index
    %c0_12 = arith.constant 0 : index
    %c0_13 = arith.constant 0 : index
    %15 = vector.load %arg3[%c1_11, %c0_12, %c0_13] : memref<3x1x128xf32, #tpu.memory_space<vmem>>, vector<1x1x128xf32>
    %16 = vector.shape_cast %15 : vector<1x1x128xf32> to vector<1x128xf32>
    %17 = vector.broadcast %16 : vector<1x128xf32> to vector<8x128xf32>
    %18 = arith.addf %14, %17 : vector<8x128xf32>
    %cst_14 = arith.constant 0.000000e+00 : f32
    %19 = vector.broadcast %cst_14 : f32 to vector<8x128xf32>
    %20 = arith.maximumf %18, %19 : vector<8x128xf32>
    %21 = arith.truncf %20 : vector<8x128xf32> to vector<8x128xbf16>
    %c2 = arith.constant 2 : index
    %c0_15 = arith.constant 0 : index
    %c0_16 = arith.constant 0 : index
    %22 = vector.load %arg2[%c2, %c0_15, %c0_16] : memref<3x128x128xbf16, #tpu.memory_space<vmem>>, vector<1x128x128xbf16>
    %23 = vector.shape_cast %22 : vector<1x128x128xbf16> to vector<128x128xbf16>
    %cst_17 = arith.constant dense<0.000000e+00> : vector<8x128xf32>
    %24 = tpu.matmul %21, %23, %cst_17 {dimension_numbers = #tpu.dot_dimension_numbers<[1], [0], [0], [1], [0, 0, 1, 1], [], []>} : vector<8x128xbf16>, vector<128x128xbf16>, vector<8x128xf32> -> vector<8x128xf32>
    %c2_18 = arith.constant 2 : index
    %c0_19 = arith.constant 0 : index
    %c0_20 = arith.constant 0 : index
    %25 = vector.load %arg3[%c2_18, %c0_19, %c0_20] : memref<3x1x128xf32, #tpu.memory_space<vmem>>, vector<1x1x128xf32>
    %26 = vector.shape_cast %25 : vector<1x1x128xf32> to vector<1x128xf32>
    %27 = vector.broadcast %26 : vector<1x128xf32> to vector<8x128xf32>
    %28 = arith.addf %24, %27 : vector<8x128xf32>
    %c0_21 = arith.constant 0 : index
    %c0_22 = arith.constant 0 : index
    %29 = vector.load %arg4[%c0_21, %c0_22] : memref<8x128xf32, #tpu.memory_space<vmem>>, vector<8x128xf32>
    tpu.vector_store %arg4[%c0_21, %c0_22], %28 {strides = array<i32>} : memref<8x128xf32, #tpu.memory_space<vmem>>, vector<8x128xf32>,
    return
  }
  func.func @transform_0(%arg0: i32) -> (i32, i32) {
    %c0_i32 = arith.constant 0 : i32
    %c0_i32_0 = arith.constant 0 : i32
    return %arg0, %c0_i32 : i32, i32
  }
  func.func @transform_1(%arg0: i32) -> (i32, i32, i32) {
    %c0_i32 = arith.constant 0 : i32
    %c0_i32_0 = arith.constant 0 : i32
    %c0_i32_1 = arith.constant 0 : i32
    %c0_i32_2 = arith.constant 0 : i32
    return %c0_i32, %c0_i32_0, %c0_i32_1 : i32, i32, i32
  }
  func.func @transform_2(%arg0: i32) -> (i32, i32, i32) {
    %c0_i32 = arith.constant 0 : i32
    %c0_i32_0 = arith.constant 0 : i32
    %c0_i32_1 = arith.constant 0 : i32
    %c0_i32_2 = arith.constant 0 : i32
    return %c0_i32, %c0_i32_0, %c0_i32_1 : i32, i32, i32
  }
  func.func @transform_3(%arg0: i32) -> (i32, i32) {
    %c0_i32 = arith.constant 0 : i32
    %c0_i32_0 = arith.constant 0 : i32
    return %arg0, %c0_i32 : i32, i32
  }
}

</mosaic_0001>

<llo_original>
// kernel: tpu_custom_call.1
$region0: #{tpu_custom_call.1}
  #allocation0 [shape = 'u32[]', space=smem, size = 0x4, offset = 0x4, fixed_abs, tag = 'smem constant byte address 0x4 - core index']
  #allocation1 [shape = 'u32[72,128]{1,0:T(1,128)}', space=vmem, size = 0x9000, scoped, tag = 'internal scratch']
  %s0 = inlined_call_operand.hbm [shape: f32[8,128], index: 0, kind: input, shape index: {}]
  %s1 = inlined_call_operand.hbm [shape: bf16[3,128,128], index: 1, kind: input, shape index: {}]
  %s2 = inlined_call_operand.hbm [shape: f32[3,1,128], index: 2, kind: input, shape index: {}]
  %s3 = inlined_call_operand.hbm [shape: f32[8,128], index: 3, kind: output, shape index: {}]
  %s4 = sld [smem:[#allocation0]]
  $region34: #{tpu_custom_call.1} parent=0
    _
  %s6 = ssub.s32 1, %s4
  %s7 = scalar_select 0, %s6, %s4
  $region1: #{tpu_custom_call.1} parent=0
    #allocation2 [shape = 'u8[4096]{0}', space=vmem, size = 0x1000, scoped, tag = 'input window, operand 0, single buffered']
    #allocation3 [shape = 's32[1]{0}', space=sflag, size = 0x4, scoped, tag = 'scoped memory for tpu_custom_call.1']
    #allocation4 [shape = 's32[1]{0}', space=sflag, size = 0x4, scoped, tag = 'scoped memory for tpu_custom_call.1']
    #allocation5 [shape = 'u8[98304]{0}', space=vmem, size = 0x18000, scoped, tag = 'input window, operand 1, single buffered']
    #allocation6 [shape = 's32[1]{0}', space=sflag, size = 0x4, scoped, tag = 'scoped memory for tpu_custom_call.1']
    #allocation7 [shape = 'u8[1536]{0}', space=vmem, size = 0x800, scoped, tag = 'input window, operand 2, single buffered']
    #allocation8 [shape = 'u8[4096]{0}', space=vmem, size = 0x1000, scoped, tag = 'output window, operand 0, single buffered']
    %8 = vsyncpa [#allocation3], 0
    %9 = vsyncpa [#allocation6], 0
    %10 = vsyncpa [#allocation4], 0
    // Predicated region
    $region2: #{tpu_custom_call.1} parent=1 // pred_check
      _
    $region3: #{tpu_custom_call.1} parent=1 // pred_check_branch
      %12 = sbr.rel (0) target = $region5
    $region4: #{tpu_custom_call.1} parent=1 // pred_region
      %14 = vsyncadd [#allocation3], 0
      %s16 = sshll.u32 %s0, 4
      %s17 = int_to_ptr.hbm [resolvable:$true] %s16
      %s18 = sshll.u32 [#allocation2], 4
      %s19 = int_to_ptr.vmem [resolvable:$true] %s18
      %21 = dma.hbm_to_vmem [thread:$0]  %s17, 128, %s19, [#allocation3]
    $region5: #{tpu_custom_call.1} parent=1 // pred_fallthru
      _
    // Predicated region
    $region6: #{tpu_custom_call.1} parent=1 // pred_check
      _
    $region7: #{tpu_custom_call.1} parent=1 // pred_check_branch
      %23 = sbr.rel (0) target = $region9
    $region8: #{tpu_custom_call.1} parent=1 // pred_region
      %25 = vsyncadd [#allocation6], 0
      %s26 = sshll.u32 %s1, 4
      %s27 = int_to_ptr.hbm [resolvable:$true] %s26
      %s28 = sshll.u32 [#allocation5], 4
      %s29 = int_to_ptr.vmem [resolvable:$true] %s28
      %34 = dma.hbm_to_vmem [thread:$0]  %s27, 3072, %s29, [#allocation6], 64, 64, 4
    $region9: #{tpu_custom_call.1} parent=1 // pred_fallthru
      _
    // Predicated region
    $region10: #{tpu_custom_call.1} parent=1 // pred_check
      _
    $region11: #{tpu_custom_call.1} parent=1 // pred_check_branch
      %36 = sbr.rel (0) target = $region13
    $region12: #{tpu_custom_call.1} parent=1 // pred_region
      %38 = vsyncadd [#allocation6], 0
      %s39 = sshll.u32 %s2, 4
      %s40 = int_to_ptr.hbm [resolvable:$true] %s39
      %s41 = sshll.u32 [#allocation7], 4
      %s42 = int_to_ptr.vmem [resolvable:$true] %s41
      %47 = dma.hbm_to_vmem [thread:$0]  %s40, 48, %s42, [#allocation6], 16, 16, 1
    $region13: #{tpu_custom_call.1} parent=1 // pred_fallthru
      _
    // Predicated region
    $region14: #{tpu_custom_call.1} parent=1 // pred_check
      _
    $region15: #{tpu_custom_call.1} parent=1 // pred_check_branch
      %49 = sbr.rel (0) target = $region17
    $region16: #{tpu_custom_call.1} parent=1 // pred_region
      %51 = dma.done [#allocation3], 128
    $region17: #{tpu_custom_call.1} parent=1 // pred_fallthru
      _
    // Predicated region
    $region18: #{tpu_custom_call.1} parent=1 // pred_check
      _
    $region19: #{tpu_custom_call.1} parent=1 // pred_check_branch
      %53 = sbr.rel (0) target = $region21
    $region20: #{tpu_custom_call.1} parent=1 // pred_region
      %55 = dma.done [#allocation6], 3072
    $region21: #{tpu_custom_call.1} parent=1 // pred_fallthru
      _
    // Predicated region
    $region22: #{tpu_custom_call.1} parent=1 // pred_check
      _
    $region23: #{tpu_custom_call.1} parent=1 // pred_check_branch
      %57 = sbr.rel (0) target = $region25
    $region24: #{tpu_custom_call.1} parent=1 // pred_region
      %59 = dma.done [#allocation6], 48
    $region25: #{tpu_custom_call.1} parent=1 // pred_fallthru
      _
    %v60 = vld [vmem:[#allocation2] sm:$0xff]
    %v61 = vpack.c.bf16 %v60, %v60
    %v62 = vld [vmem:[#allocation5] sm:$0xf]
    %v63 = vld [vmem:[#allocation5 + $0x4] sm:$0xf]
    %v64 = vld [vmem:[#allocation5 + $0x8] sm:$0xf]
    %v65 = vld [vmem:[#allocation5 + $0xc] sm:$0xf]
    %v66 = vld [vmem:[#allocation5 + $0x10] sm:$0xf]
    %v67 = vld [vmem:[#allocation5 + $0x14] sm:$0xf]
    %v68 = vld [vmem:[#allocation5 + $0x18] sm:$0xf]
    %v69 = vld [vmem:[#allocation5 + $0x1c] sm:$0xf]
    %v70 = vld [vmem:[#allocation5 + $0x20] sm:$0xf]
    %v71 = vld [vmem:[#allocation5 + $0x24] sm:$0xf]
    %v72 = vld [vmem:[#allocation5 + $0x28] sm:$0xf]
    %v73 = vld [vmem:[#allocation5 + $0x2c] sm:$0xf]
    %v74 = vld [vmem:[#allocation5 + $0x30] sm:$0xf]
    %v75 = vld [vmem:[#allocation5 + $0x34] sm:$0xf]
    %v76 = vld [vmem:[#allocation5 + $0x38] sm:$0xf]
    %v77 = vld [vmem:[#allocation5 + $0x3c] sm:$0xf]
    %v78 = vld [vmem:[#allocation7] sm:$0x1]
    %v80 = vperm.slane %v78, 0
    %v98 = vunpack.c.l.b16 %v62
    %v99 = vunpack.c.l.b16 %v63
    %v100 = vunpack.c.l.b16 %v64
    %v101 = vunpack.c.l.b16 %v65
    %v102 = vunpack.c.l.b16 %v66
    %v103 = vunpack.c.l.b16 %v67
    %v104 = vunpack.c.l.b16 %v68
    %v105 = vunpack.c.l.b16 %v69
    %v106 = vunpack.c.l.b16 %v70
    %v107 = vunpack.c.l.b16 %v71
    %v108 = vunpack.c.l.b16 %v72
    %v109 = vunpack.c.l.b16 %v73
    %v110 = vunpack.c.l.b16 %v74
    %v111 = vunpack.c.l.b16 %v75
    %v112 = vunpack.c.l.b16 %v76
    %v113 = vunpack.c.l.b16 %v77
    %v114 = vpack.c.b16 %v99, %v98
    %v115 = vpack.c.b16 %v101, %v100
    %v116 = vpack.c.b16 %v103, %v102
    %v117 = vpack.c.b16 %v105, %v104
    %v118 = vpack.c.b16 %v107, %v106
    %v119 = vpack.c.b16 %v109, %v108
    %v120 = vpack.c.b16 %v111, %v110
    %v121 = vpack.c.b16 %v113, %v112
    %130 = vmatpush.bf16.msra.mxu0 %v121
    %131 = vmatpush.bf16.msra.mxu0 %v120
    %132 = vmatpush.bf16.msra.mxu0 %v119
    %133 = vmatpush.bf16.msra.mxu0 %v118
    %134 = vmatpush.bf16.msra.mxu0 %v117
    %135 = vmatpush.bf16.msra.mxu0 %v116
    %136 = vmatpush.bf16.msra.mxu0 %v115
    %137 = vmatpush.bf16.msra.mxu0 %v114
    %138 = vmatmul.bf16.gmra.mxu0 %v61
    %v139 = vpop.f32.mrf.mxu0
    %v140 = vadd.f32 %v80, %v139
    %v141 = vpop.f32.mrf.mxu0
    %142 = vdwg.mxu0
    %v143 = vmax.f32 %v140, 0.0
    %v144 = vpack.c.bf16 %v143, %v143
    %s145 = scalar_lea.vmem [#allocation5], 64
    %v146 = vld [vmem:[%s145] sm:$0xf]
    %v147 = vld [vmem:[%s145 + $0x4] sm:$0xf]
    %v148 = vld [vmem:[%s145 + $0x8] sm:$0xf]
    %v149 = vld [vmem:[%s145 + $0xc] sm:$0xf]
    %v150 = vld [vmem:[%s145 + $0x10] sm:$0xf]
    %v151 = vld [vmem:[%s145 + $0x14] sm:$0xf]
    %v152 = vld [vmem:[%s145 + $0x18] sm:$0xf]
    %v153 = vld [vmem:[%s145 + $0x1c] sm:$0xf]
    %v154 = vld [vmem:[%s145 + $0x20] sm:$0xf]
    %v155 = vld [vmem:[%s145 + $0x24] sm:$0xf]
    %v156 = vld [vmem:[%s145 + $0x28] sm:$0xf]
    %v157 = vld [vmem:[%s145 + $0x2c] sm:$0xf]
    %v158 = vld [vmem:[%s145 + $0x30] sm:$0xf]
    %v159 = vld [vmem:[%s145 + $0x34] sm:$0xf]
    %v160 = vld [vmem:[%s145 + $0x38] sm:$0xf]
    %v161 = vld [vmem:[%s145 + $0x3c] sm:$0xf]
    %s162 = scalar_lea.vmem [#allocation7], 1
    %v163 = vld [vmem:[%s162] sm:$0x1]
    %v165 = vperm.slane %v163, 0
    %v183 = vunpack.c.l.b16 %v146
    %v184 = vunpack.c.l.b16 %v147
    %v185 = vunpack.c.l.b16 %v148
    %v186 = vunpack.c.l.b16 %v149
    %v187 = vunpack.c.l.b16 %v150
    %v188 = vunpack.c.l.b16 %v151
    %v189 = vunpack.c.l.b16 %v152
    %v190 = vunpack.c.l.b16 %v153
    %v191 = vunpack.c.l.b16 %v154
    %v192 = vunpack.c.l.b16 %v155
    %v193 = vunpack.c.l.b16 %v156
    %v194 = vunpack.c.l.b16 %v157
    %v195 = vunpack.c.l.b16 %v158
    %v196 = vunpack.c.l.b16 %v159
    %v197 = vunpack.c.l.b16 %v160
    %v198 = vunpack.c.l.b16 %v161
    %v199 = vpack.c.b16 %v184, %v183
    %v200 = vpack.c.b16 %v186, %v185
    %v201 = vpack.c.b16 %v188, %v187
    %v202 = vpack.c.b16 %v190, %v189
    %v203 = vpack.c.b16 %v192, %v191
    %v204 = vpack.c.b16 %v194, %v193
    %v205 = vpack.c.b16 %v196, %v195
    %v206 = vpack.c.b16 %v198, %v197
    %215 = vmatpush.bf16.msra.mxu0 %v206
    %216 = vmatpush.bf16.msra.mxu0 %v205
    %217 = vmatpush.bf16.msra.mxu0 %v204
    %218 = vmatpush.bf16.msra.mxu0 %v203
    %219 = vmatpush.bf16.msra.mxu0 %v202
    %220 = vmatpush.bf16.msra.mxu0 %v201
    %221 = vmatpush.bf16.msra.mxu0 %v200
    %222 = vmatpush.bf16.msra.mxu0 %v199
    %223 = vmatmul.bf16.gmra.mxu0 %v144
    %v224 = vpop.f32.mrf.mxu0
    %v225 = vadd.f32 %v165, %v224
    %v226 = vpop.f32.mrf.mxu0
    %227 = vdwg.mxu0
    %v228 = vmax.f32 %v225, 0.0
    %v229 = vpack.c.bf16 %v228, %v228
    %s230 = scalar_lea.vmem [#allocation5], 128
    %v231 = vld [vmem:[%s230] sm:$0xf]
    %v232 = vld [vmem:[%s230 + $0x4] sm:$0xf]
    %v233 = vld [vmem:[%s230 + $0x8] sm:$0xf]
    %v234 = vld [vmem:[%s230 + $0xc] sm:$0xf]
    %v235 = vld [vmem:[%s230 + $0x10] sm:$0xf]
    %v236 = vld [vmem:[%s230 + $0x14] sm:$0xf]
    %v237 = vld [vmem:[%s230 + $0x18] sm:$0xf]
    %v238 = vld [vmem:[%s230 + $0x1c] sm:$0xf]
    %v239 = vld [vmem:[%s230 + $0x20] sm:$0xf]
    %v240 = vld [vmem:[%s230 + $0x24] sm:$0xf]
    %v241 = vld [vmem:[%s230 + $0x28] sm:$0xf]
    %v242 = vld [vmem:[%s230 + $0x2c] sm:$0xf]
    %v243 = vld [vmem:[%s230 + $0x30] sm:$0xf]
    %v244 = vld [vmem:[%s230 + $0x34] sm:$0xf]
    %v245 = vld [vmem:[%s230 + $0x38] sm:$0xf]
    %v246 = vld [vmem:[%s230 + $0x3c] sm:$0xf]
    %s247 = scalar_lea.vmem [#allocation7], 2
    %v248 = vld [vmem:[%s247] sm:$0x1]
    %v250 = vperm.slane %v248, 0
    %v268 = vunpack.c.l.b16 %v231
    %v269 = vunpack.c.l.b16 %v232
    %v270 = vunpack.c.l.b16 %v233
    %v271 = vunpack.c.l.b16 %v234
    %v272 = vunpack.c.l.b16 %v235
    %v273 = vunpack.c.l.b16 %v236
    %v274 = vunpack.c.l.b16 %v237
    %v275 = vunpack.c.l.b16 %v238
    %v276 = vunpack.c.l.b16 %v239
    %v277 = vunpack.c.l.b16 %v240
    %v278 = vunpack.c.l.b16 %v241
    %v279 = vunpack.c.l.b16 %v242
    %v280 = vunpack.c.l.b16 %v243
    %v281 = vunpack.c.l.b16 %v244
    %v282 = vunpack.c.l.b16 %v245
    %v283 = vunpack.c.l.b16 %v246
    %v284 = vpack.c.b16 %v269, %v268
    %v285 = vpack.c.b16 %v271, %v270
    %v286 = vpack.c.b16 %v273, %v272
    %v287 = vpack.c.b16 %v275, %v274
    %v288 = vpack.c.b16 %v277, %v276
    %v289 = vpack.c.b16 %v279, %v278
    %v290 = vpack.c.b16 %v281, %v280
    %v291 = vpack.c.b16 %v283, %v282
    %300 = vmatpush.bf16.msra.mxu0 %v291
    %301 = vmatpush.bf16.msra.mxu0 %v290
    %302 = vmatpush.bf16.msra.mxu0 %v289
    %303 = vmatpush.bf16.msra.mxu0 %v288
    %304 = vmatpush.bf16.msra.mxu0 %v287
    %305 = vmatpush.bf16.msra.mxu0 %v286
    %306 = vmatpush.bf16.msra.mxu0 %v285
    %307 = vmatpush.bf16.msra.mxu0 %v284
    %308 = vmatmul.bf16.gmra.mxu0 %v229
    %v309 = vpop.f32.mrf.mxu0
    %v310 = vadd.f32 %v250, %v309
    %v311 = vpop.f32.mrf.mxu0
    %312 = vdwg.mxu0
    %313 = vst [vmem:[#allocation8] sm:$0xff] %v310
    // Predicated region
    $region26: #{tpu_custom_call.1} parent=1 // pred_check
      _
    $region27: #{tpu_custom_call.1} parent=1 // pred_check_branch
      %315 = sbr.rel (0) target = $region29
    $region28: #{tpu_custom_call.1} parent=1 // pred_region
      %317 = vsyncadd [#allocation4], 0
      %s319 = sshll.u32 [#allocation8], 4
      %s320 = int_to_ptr.vmem [resolvable:$true] %s319
      %s321 = sshll.u32 %s3, 4
      %s322 = int_to_ptr.hbm [resolvable:$true] %s321
      %324 = dma.vmem_to_hbm [thread:$0]  %s320, 128, %s322, [#allocation4]
    $region29: #{tpu_custom_call.1} parent=1 // pred_fallthru
      _
    // Predicated region
    $region30: #{tpu_custom_call.1} parent=1 // pred_check
      _
    $region31: #{tpu_custom_call.1} parent=1 // pred_check_branch
      %326 = sbr.rel (0) target = $region33
    $region32: #{tpu_custom_call.1} parent=1 // pred_region
      %328 = dma.done [#allocation4], 128
    $region33: #{tpu_custom_call.1} parent=1 // pred_fallthru
      _
    %329 = vsyncpa [#allocation3], 1
    %330 = vsyncpa [#allocation6], 1
    %331 = vsyncpa [#allocation4], 1

</llo_original>
